<compile_context>
chip_gen: v7x
topology: tpu7x:2x2x1
jax: 0.10.0
libtpu: 0.0.40
codegen_flags: <defaults>
</compile_context>

<pallas_src>
import functools

import jax
import jax.numpy as jnp
from jax import lax
from jax.experimental import pallas as pl
from jax.experimental.pallas import tpu as pltpu


def _fused_qlinear_x3_kernel(qp_ref, x_ref, w_ref, wzp_ref, corr_ref,
                             scale_ref, bias_ref, o_ref):
    """Runs the 3 chained qlinear layers on one tile of rows.

    qp_ref    : SMEM f32[2]      [1/input_scale, input_zero_point]
    x_ref     : VMEM f32[tm, K]  activation rows for this grid step
    w_ref     : VMEM bf16[N, K]  shared weight (constant index_map -> loaded once)
    wzp_ref   : VMEM f32[1, N]   per-channel weight zero points
    corr_ref  : VMEM f32[1, N]   -zp_x * (rowsum(q_w) - K * w_zp)  (rank-1 zp corr.)
    scale_ref : VMEM f32[1, N]   input_scale * weight_scale (combined dequant)
    bias_ref  : VMEM f32[1, N]
    o_ref     : VMEM [tm, N]     output of the 3rd layer (output_dtype)
    """
    inv_s = qp_ref[0]
    zp = qp_ref[1]

    w = w_ref[...]                  # bf16 [N, K], resident across the chain
    wzp = wzp_ref[...]              # [1, N]
    corr = corr_ref[...]            # [1, N]
    scale = scale_ref[...]          # [1, N]
    bias = bias_ref[...]            # [1, N]

    def qlinear_layer(act_f32):
        # uint8 asymmetric activation quantization (round-half-to-even like torch)
        qx = jnp.clip(jnp.round(act_f32 * inv_s) + zp, 0.0, 255.0)       # [tm, K]
        xsum = jnp.sum(qx, axis=1, keepdims=True)                        # [tm, 1]
        # bf16 MXU matmul, contracting K directly from the [N, K] weight layout.
        raw = lax.dot_general(
            qx.astype(jnp.bfloat16), w,
            dimension_numbers=(((1,), (1,)), ((), ())),
            preferred_element_type=jnp.float32)                          # [tm, N]
        # acc == (qx - zp_x) @ (q_w - w_zp)^T   via rank-1 zero-point corrections
        acc = raw + corr - wzp * xsum
        out = acc * scale + bias
        return out.astype(o_ref.dtype)

    y = qlinear_layer(x_ref[...].astype(jnp.float32))
    y = qlinear_layer(y.astype(jnp.float32))
    y = qlinear_layer(y.astype(jnp.float32))
    o_ref[...] = y


@functools.partial(jax.jit, static_argnames=("output_dtype",))
def custom_model_zentorch_qlinear_x3(inp, weights, biases, input_scales,
                                     input_zero_points, weight_scales,
                                     weight_zero_points,
                                     output_dtype=jnp.float32):
    """Forward pass of the 3x chained zentorch_qlinear module (single fused kernel)."""
    M, K = inp.shape
    N = weights.shape[0]
    assert weights.shape == (N, K)
    assert N == K, "3x chained qlinear with a shared weight requires a square weight"

    # ---- invariants shared by all three layers (computed once, not per layer) ----
    in_scale = input_scales.reshape(-1)[0].astype(jnp.float32)
    zp = input_zero_points.reshape(-1)[0].astype(jnp.float32)
    qp = jnp.stack([1.0 / in_scale, zp]).astype(jnp.float32)             # SMEM scalars

    w_bf16 = weights.astype(jnp.bfloat16)                                # exact for int8
    wzp_row = weight_zero_points.reshape(1, N).astype(jnp.float32)       # [1, N]
    wsum = jnp.sum(weights.astype(jnp.float32), axis=1).reshape(1, N)    # [1, N]
    corr = -zp * (wsum - float(K) * wzp_row)                             # [1, N]
    comb_scale = (in_scale * weight_scales.reshape(1, N)).astype(jnp.float32)
    bias_row = biases.reshape(1, N).astype(jnp.float32)

    # ---- row tiling: rows are independent through the whole 3-layer chain ----
    tm = M if M <= 512 else 256
    grid_m = pl.cdiv(M, tm)

    out_bytes = jnp.dtype(output_dtype).itemsize
    vmem_est = (2 * N * K * 2                              # double-buffered bf16 weight
                + 2 * 2 * tm * K * 4                       # activation tiles
                + 2 * 2 * tm * N * out_bytes               # output tiles
                + 8 * N * 4 + (2 << 20))                   # row vectors + slack
    vmem_limit = int(min(max(vmem_est, 8 << 20), 48 << 20))

    return pl.pallas_call(
        _fused_qlinear_x3_kernel,
        out_shape=jax.ShapeDtypeStruct((M, N), output_dtype),
        grid=(grid_m,),
        in_specs=[
            pl.BlockSpec(memory_space=pltpu.SMEM),          # quant params [2]
            pl.BlockSpec((tm, K), lambda i: (i, 0)),        # activations
            pl.BlockSpec((N, K), lambda i: (0, 0)),         # bf16 weight (resident)
            pl.BlockSpec((1, N), lambda i: (0, 0)),         # weight zero points
            pl.BlockSpec((1, N), lambda i: (0, 0)),         # rank-1 zp correction
            pl.BlockSpec((1, N), lambda i: (0, 0)),         # combined dequant scale
            pl.BlockSpec((1, N), lambda i: (0, 0)),         # bias
        ],
        out_specs=pl.BlockSpec((tm, N), lambda i: (i, 0)),
        compiler_params=pltpu.CompilerParams(
            dimension_semantics=("parallel",),              # shard M tiles across TCs (v7x)
            vmem_limit_bytes=vmem_limit),
    )(qp, inp, w_bf16, wzp_row, corr, comb_scale, bias_row)


def _qlinear_ref(x, wq, bias, in_scale, in_zp, w_scales, w_zps, output_dtype):
    """Pure-JAX reference for a single zentorch_qlinear (for verification)."""
    scale = in_scale.reshape(-1)[0].astype(jnp.float32)
    zp = in_zp.reshape(-1)[0].astype(jnp.float32)
    inv_s = 1.0 / scale
    qx = jnp.clip(jnp.round(x.astype(jnp.float32) * inv_s) + zp, 0.0, 255.0)
    wc = wq.astype(jnp.float32) - w_zps.reshape(-1, 1).astype(jnp.float32)   # [N, K]
    acc = (qx - zp) @ wc.T                                                   # [M, N]
    out = acc * (scale * w_scales.reshape(1, -1)) + bias.reshape(1, -1)
    return out.astype(output_dtype)


if __name__ == "__main__":
    key = jax.random.PRNGKey(0)
    k_x, k_w, k_b, k_ws = jax.random.split(key, 4)

    M, K = 8, 32          # batch x hidden
    N = K                 # square weight (required by the 3x chain)

    x = jax.random.normal(k_x, (M, K), dtype=jnp.float32)
    weights = jax.random.randint(k_w, (N, K), -127, 128, dtype=jnp.int32).astype(jnp.int8)
    biases = (0.1 * jax.random.normal(k_b, (1, N), dtype=jnp.float32)).astype(jnp.float32)

    input_scales = jnp.array([0.05], dtype=jnp.float32)          # per-tensor activation scale
    input_zero_points = jnp.array([128], dtype=jnp.int32)        # uint8 asymmetric zp
    weight_scales = jax.random.uniform(k_ws, (1, N), minval=0.005, maxval=0.02,
                                       dtype=jnp.float32)        # per-out-channel
    weight_zero_points = jnp.zeros((N, 1), dtype=jnp.int32)      # symmetric int8 weights

    out = custom_model_zentorch_qlinear_x3(
        x, weights, biases, input_scales, input_zero_points,
        weight_scales, weight_zero_points, output_dtype=jnp.float32)
    out = jax.block_until_ready(out)

    # reference: three chained qlinear ops
    ref = x
    for _ in range(3):
        ref = _qlinear_ref(ref, weights, biases, input_scales, input_zero_points,
                           weight_scales, weight_zero_points, jnp.float32)

    assert out.shape == (M, N) and out.dtype == jnp.float32
    max_err = float(jnp.max(jnp.abs(out - ref)))
    assert jnp.allclose(out, ref, rtol=1e-3, atol=1e-2), f"max abs err {max_err}"
    print("KERNEL_OK")
</pallas_src>

<mosaic_0001>
module attributes {stable_mosaic.version = 11 : i64} {
  func.func @_fused_qlinear_x3_kernel(%arg0: i32, %arg1: memref<2xf32, #tpu.memory_space<smem>>, %arg2: memref<8x32xf32, #tpu.memory_space<vmem>>, %arg3: memref<32x32xbf16, #tpu.memory_space<vmem>>, %arg4: memref<1x32xf32, #tpu.memory_space<vmem>>, %arg5: memref<1x32xf32, #tpu.memory_space<vmem>>, %arg6: memref<1x32xf32, #tpu.memory_space<vmem>>, %arg7: memref<1x32xf32, #tpu.memory_space<vmem>>, %arg8: memref<8x32xf32, #tpu.memory_space<vmem>>) attributes {dimension_semantics = [#tpu.dimension_semantics<parallel>], iteration_bounds = array<i64: 1>, scalar_prefetch = 0 : i64, scratch_operands = 0 : i64, tpu.core_type = #tpu.core_type<tc>, window_params = [{transform_indices = @transform_0, window_bounds = array<i64: 2>}, {transform_indices = @transform_1, window_bounds = array<i64: 8, 32>}, {pipeline_mode = #tpu.pipeline_mode<synchronous>, transform_indices = @transform_2, window_bounds = array<i64: 32, 32>}, {pipeline_mode = #tpu.pipeline_mode<synchronous>, transform_indices = @transform_3, window_bounds = array<i64: 1, 32>}, {pipeline_mode = #tpu.pipeline_mode<synchronous>, transform_indices = @transform_4, window_bounds = array<i64: 1, 32>}, {pipeline_mode = #tpu.pipeline_mode<synchronous>, transform_indices = @transform_5, window_bounds = array<i64: 1, 32>}, {pipeline_mode = #tpu.pipeline_mode<synchronous>, transform_indices = @transform_6, window_bounds = array<i64: 1, 32>}, {transform_indices = @transform_7, window_bounds = array<i64: 8, 32>}]} {
    %c0 = arith.constant 0 : index
    %0 = memref.load %arg1[%c0] : memref<2xf32, #tpu.memory_space<smem>>
    %c1 = arith.constant 1 : index
    %1 = memref.load %arg1[%c1] : memref<2xf32, #tpu.memory_space<smem>>
    %c0_0 = arith.constant 0 : index
    %c0_1 = arith.constant 0 : index
    %2 = vector.load %arg3[%c0_0, %c0_1] : memref<32x32xbf16, #tpu.memory_space<vmem>>, vector<32x32xbf16>
    %c0_2 = arith.constant 0 : index
    %c0_3 = arith.constant 0 : index
    %3 = vector.load %arg4[%c0_2, %c0_3] : memref<1x32xf32, #tpu.memory_space<vmem>>, vector<1x32xf32>
    %c0_4 = arith.constant 0 : index
    %c0_5 = arith.constant 0 : index
    %4 = vector.load %arg5[%c0_4, %c0_5] : memref<1x32xf32, #tpu.memory_space<vmem>>, vector<1x32xf32>
    %c0_6 = arith.constant 0 : index
    %c0_7 = arith.constant 0 : index
    %5 = vector.load %arg6[%c0_6, %c0_7] : memref<1x32xf32, #tpu.memory_space<vmem>>, vector<1x32xf32>
    %c0_8 = arith.constant 0 : index
    %c0_9 = arith.constant 0 : index
    %6 = vector.load %arg7[%c0_8, %c0_9] : memref<1x32xf32, #tpu.memory_space<vmem>>, vector<1x32xf32>
    %c0_10 = arith.constant 0 : index
    %c0_11 = arith.constant 0 : index
    %7 = vector.load %arg2[%c0_10, %c0_11] : memref<8x32xf32, #tpu.memory_space<vmem>>, vector<8x32xf32>
    %8 = vector.broadcast %0 : f32 to vector<8x32xf32>
    %9 = arith.mulf %7, %8 : vector<8x32xf32>
    %10 = math.roundeven %9 : vector<8x32xf32>
    %11 = vector.broadcast %1 : f32 to vector<8x32xf32>
    %12 = arith.addf %10, %11 : vector<8x32xf32>
    %cst = arith.constant 0.000000e+00 : f32
    %cst_12 = arith.constant 2.550000e+02 : f32
    %13 = vector.broadcast %cst : f32 to vector<8x32xf32>
    %14 = arith.maximumf %13, %12 : vector<8x32xf32>
    %15 = vector.broadcast %cst_12 : f32 to vector<8x32xf32>
    %16 = arith.minimumf %15, %14 : vector<8x32xf32>
    %cst_13 = arith.constant dense<0.000000e+00> : vector<8xf32>
    %17 = vector.multi_reduction <add>, %16, %cst_13 [1] : vector<8x32xf32> to vector<8xf32>
    %18 = vector.shape_cast %17 : vector<8xf32> to vector<8x1xf32>
    %19 = arith.truncf %16 : vector<8x32xf32> to vector<8x32xbf16>
    %cst_14 = arith.constant dense<0.000000e+00> : vector<8x32xf32>
    %20 = tpu.matmul %19, %2, %cst_14 {dimension_numbers = #tpu.dot_dimension_numbers<[1], [1], [0], [0], [0, 0, 1, 0], [], []>} : vector<8x32xbf16>, vector<32x32xbf16>, vector<8x32xf32> -> vector<8x32xf32>
    %21 = vector.broadcast %4 : vector<1x32xf32> to vector<8x32xf32>
    %22 = arith.addf %20, %21 : vector<8x32xf32>
    %23 = vector.broadcast %3 : vector<1x32xf32> to vector<8x32xf32>
    %24 = vector.broadcast %18 : vector<8x1xf32> to vector<8x32xf32>
    %25 = arith.mulf %23, %24 : vector<8x32xf32>
    %26 = arith.subf %22, %25 : vector<8x32xf32>
    %27 = vector.broadcast %5 : vector<1x32xf32> to vector<8x32xf32>
    %28 = arith.mulf %26, %27 : vector<8x32xf32>
    %29 = vector.broadcast %6 : vector<1x32xf32> to vector<8x32xf32>
    %30 = arith.addf %28, %29 : vector<8x32xf32>
    %31 = vector.broadcast %0 : f32 to vector<8x32xf32>
    %32 = arith.mulf %30, %31 : vector<8x32xf32>
    %33 = math.roundeven %32 : vector<8x32xf32>
    %34 = vector.broadcast %1 : f32 to vector<8x32xf32>
    %35 = arith.addf %33, %34 : vector<8x32xf32>
    %cst_15 = arith.constant 0.000000e+00 : f32
    %cst_16 = arith.constant 2.550000e+02 : f32
    %36 = vector.broadcast %cst_15 : f32 to vector<8x32xf32>
    %37 = arith.maximumf %36, %35 : vector<8x32xf32>
    %38 = vector.broadcast %cst_16 : f32 to vector<8x32xf32>
    %39 = arith.minimumf %38, %37 : vector<8x32xf32>
    %cst_17 = arith.constant dense<0.000000e+00> : vector<8xf32>
    %40 = vector.multi_reduction <add>, %39, %cst_17 [1] : vector<8x32xf32> to vector<8xf32>
    %41 = vector.shape_cast %40 : vector<8xf32> to vector<8x1xf32>
    %42 = arith.truncf %39 : vector<8x32xf32> to vector<8x32xbf16>
    %cst_18 = arith.constant dense<0.000000e+00> : vector<8x32xf32>
    %43 = tpu.matmul %42, %2, %cst_18 {dimension_numbers = #tpu.dot_dimension_numbers<[1], [1], [0], [0], [0, 0, 1, 0], [], []>} : vector<8x32xbf16>, vector<32x32xbf16>, vector<8x32xf32> -> vector<8x32xf32>
    %44 = vector.broadcast %4 : vector<1x32xf32> to vector<8x32xf32>
    %45 = arith.addf %43, %44 : vector<8x32xf32>
    %46 = vector.broadcast %3 : vector<1x32xf32> to vector<8x32xf32>
    %47 = vector.broadcast %41 : vector<8x1xf32> to vector<8x32xf32>
    %48 = arith.mulf %46, %47 : vector<8x32xf32>
    %49 = arith.subf %45, %48 : vector<8x32xf32>
    %50 = vector.broadcast %5 : vector<1x32xf32> to vector<8x32xf32>
    %51 = arith.mulf %49, %50 : vector<8x32xf32>
    %52 = vector.broadcast %6 : vector<1x32xf32> to vector<8x32xf32>
    %53 = arith.addf %51, %52 : vector<8x32xf32>
    %54 = vector.broadcast %0 : f32 to vector<8x32xf32>
    %55 = arith.mulf %53, %54 : vector<8x32xf32>
    %56 = math.roundeven %55 : vector<8x32xf32>
    %57 = vector.broadcast %1 : f32 to vector<8x32xf32>
    %58 = arith.addf %56, %57 : vector<8x32xf32>
    %cst_19 = arith.constant 0.000000e+00 : f32
    %cst_20 = arith.constant 2.550000e+02 : f32
    %59 = vector.broadcast %cst_19 : f32 to vector<8x32xf32>
    %60 = arith.maximumf %59, %58 : vector<8x32xf32>
    %61 = vector.broadcast %cst_20 : f32 to vector<8x32xf32>
    %62 = arith.minimumf %61, %60 : vector<8x32xf32>
    %cst_21 = arith.constant dense<0.000000e+00> : vector<8xf32>
    %63 = vector.multi_reduction <add>, %62, %cst_21 [1] : vector<8x32xf32> to vector<8xf32>
    %64 = vector.shape_cast %63 : vector<8xf32> to vector<8x1xf32>
    %65 = arith.truncf %62 : vector<8x32xf32> to vector<8x32xbf16>
    %cst_22 = arith.constant dense<0.000000e+00> : vector<8x32xf32>
    %66 = tpu.matmul %65, %2, %cst_22 {dimension_numbers = #tpu.dot_dimension_numbers<[1], [1], [0], [0], [0, 0, 1, 0], [], []>} : vector<8x32xbf16>, vector<32x32xbf16>, vector<8x32xf32> -> vector<8x32xf32>
    %67 = vector.broadcast %4 : vector<1x32xf32> to vector<8x32xf32>
    %68 = arith.addf %66, %67 : vector<8x32xf32>
    %69 = vector.broadcast %3 : vector<1x32xf32> to vector<8x32xf32>
    %70 = vector.broadcast %64 : vector<8x1xf32> to vector<8x32xf32>
    %71 = arith.mulf %69, %70 : vector<8x32xf32>
    %72 = arith.subf %68, %71 : vector<8x32xf32>
    %73 = vector.broadcast %5 : vector<1x32xf32> to vector<8x32xf32>
    %74 = arith.mulf %72, %73 : vector<8x32xf32>
    %75 = vector.broadcast %6 : vector<1x32xf32> to vector<8x32xf32>
    %76 = arith.addf %74, %75 : vector<8x32xf32>
    %c0_23 = arith.constant 0 : index
    %c0_24 = arith.constant 0 : index
    %77 = vector.load %arg8[%c0_23, %c0_24] : memref<8x32xf32, #tpu.memory_space<vmem>>, vector<8x32xf32>
    tpu.vector_store %arg8[%c0_23, %c0_24], %76 {strides = array<i32>} : memref<8x32xf32, #tpu.memory_space<vmem>>, vector<8x32xf32>,
    return
  }
  func.func @transform_0(%arg0: i32) -> i32 {
    %c0_i32 = arith.constant 0 : i32
    %c0_i32_0 = arith.constant 0 : i32
    return %c0_i32 : i32
  }
  func.func @transform_1(%arg0: i32) -> (i32, i32) {
    %c0_i32 = arith.constant 0 : i32
    %c0_i32_0 = arith.constant 0 : i32
    return %arg0, %c0_i32 : i32, i32
  }
  func.func @transform_2(%arg0: i32) -> (i32, i32) {
    %c0_i32 = arith.constant 0 : i32
    %c0_i32_0 = arith.constant 0 : i32
    %c0_i32_1 = arith.constant 0 : i32
    return %c0_i32, %c0_i32_0 : i32, i32
  }
  func.func @transform_3(%arg0: i32) -> (i32, i32) {
    %c0_i32 = arith.constant 0 : i32
    %c0_i32_0 = arith.constant 0 : i32
    %c0_i32_1 = arith.constant 0 : i32
    return %c0_i32, %c0_i32_0 : i32, i32
  }
  func.func @transform_4(%arg0: i32) -> (i32, i32) {
    %c0_i32 = arith.constant 0 : i32
    %c0_i32_0 = arith.constant 0 : i32
    %c0_i32_1 = arith.constant 0 : i32
    return %c0_i32, %c0_i32_0 : i32, i32
  }
  func.func @transform_5(%arg0: i32) -> (i32, i32) {
    %c0_i32 = arith.constant 0 : i32
    %c0_i32_0 = arith.constant 0 : i32
    %c0_i32_1 = arith.constant 0 : i32
    return %c0_i32, %c0_i32_0 : i32, i32
  }
  func.func @transform_6(%arg0: i32) -> (i32, i32) {
    %c0_i32 = arith.constant 0 : i32
    %c0_i32_0 = arith.constant 0 : i32
    %c0_i32_1 = arith.constant 0 : i32
    return %c0_i32, %c0_i32_0 : i32, i32
  }
  func.func @transform_7(%arg0: i32) -> (i32, i32) {
    %c0_i32 = arith.constant 0 : i32
    %c0_i32_0 = arith.constant 0 : i32
    return %arg0, %c0_i32 : i32, i32
  }
}

</mosaic_0001>

<llo_original>
// kernel: custom_model_zentorch_qlinear_x3.1
$region0: #{custom_model_zentorch_qlinear_x3.1}
  #allocation0 [shape = 'u32[]', space=smem, size = 0x4, offset = 0x4, fixed_abs, tag = 'smem constant byte address 0x4 - core index']
  #allocation1 [shape = 'u32[144,128]{1,0:T(1,128)}', space=vmem, size = 0x12000, scoped, tag = 'internal scratch']
  %s0 = inlined_call_operand.vmem [shape: f32[2], index: 0, kind: input, shape index: {}]
  %s1 = inlined_call_operand.vmem [shape: f32[8,32], index: 1, kind: input, shape index: {}]
  %s2 = inlined_call_operand.vmem [shape: bf16[32,32], index: 2, kind: input, shape index: {}]
  %s3 = inlined_call_operand.vmem [shape: f32[1,32], index: 3, kind: input, shape index: {}]
  %s4 = inlined_call_operand.vmem [shape: f32[1,32], index: 4, kind: input, shape index: {}]
  %s5 = inlined_call_operand.vmem [shape: f32[1,32], index: 5, kind: input, shape index: {}]
  %s6 = inlined_call_operand.vmem [shape: f32[1,32], index: 6, kind: input, shape index: {}]
  %s7 = inlined_call_operand.hbm [shape: f32[8,32], index: 7, kind: output, shape index: {}]
  %s8 = sld [smem:[#allocation0]]
  $region42: #{custom_model_zentorch_qlinear_x3.1} parent=0
    _
  %s10 = ssub.s32 1, %s8
  %s11 = scalar_select 0, %s10, %s8
  $region1: #{custom_model_zentorch_qlinear_x3.1} parent=0
    #allocation2 [shape = 'u8[512]{0}', space=smem, size = 0x200, scoped, tag = 'input window, operand 0, single buffered']
    #allocation3 [shape = 's32[1]{0}', space=sflag, size = 0x4, scoped, tag = 'scoped memory for custom_model_zentorch_qlinear_x3.1']
    #allocation4 [shape = 's32[1]{0}', space=sflag, size = 0x4, scoped, tag = 'scoped memory for custom_model_zentorch_qlinear_x3.1']
    #allocation5 [shape = 'u8[4096]{0}', space=vmem, size = 0x1000, scoped, tag = 'output window, operand 0, single buffered']
    %12 = vsyncpa [#allocation4], 0
    %13 = vsyncpa [#allocation3], 0
    // Predicated region
    $region2: #{custom_model_zentorch_qlinear_x3.1} parent=1 // pred_check
      _
    $region3: #{custom_model_zentorch_qlinear_x3.1} parent=1 // pred_check_branch
      %15 = sbr.rel (0) target = $region5
    $region4: #{custom_model_zentorch_qlinear_x3.1} parent=1 // pred_region
      %s17 = ssub.s32 16, 16
      %18 = vsyncadd [#allocation4], %s17
      %s20 = sshll.u32 %s0, 4
      %s21 = int_to_ptr.vmem [resolvable:$true] %s20
      %23 = dma.vmem_to_smem %s21, 16, [#allocation2], [#allocation4]
    $region5: #{custom_model_zentorch_qlinear_x3.1} parent=1 // pred_fallthru
      _
    // Predicated region
    $region6: #{custom_model_zentorch_qlinear_x3.1} parent=1 // pred_check
      _
    $region7: #{custom_model_zentorch_qlinear_x3.1} parent=1 // pred_check_branch
      %25 = sbr.rel (0) target = $region9
    $region8: #{custom_model_zentorch_qlinear_x3.1} parent=1 // pred_region
      _
    $region9: #{custom_model_zentorch_qlinear_x3.1} parent=1 // pred_fallthru
      _
    // Predicated region
    $region10: #{custom_model_zentorch_qlinear_x3.1} parent=1 // pred_check
      _
    $region11: #{custom_model_zentorch_qlinear_x3.1} parent=1 // pred_check_branch
      %27 = sbr.rel (0) target = $region13
    $region12: #{custom_model_zentorch_qlinear_x3.1} parent=1 // pred_region
      _
    $region13: #{custom_model_zentorch_qlinear_x3.1} parent=1 // pred_fallthru
      _
    // Predicated region
    $region14: #{custom_model_zentorch_qlinear_x3.1} parent=1 // pred_check
      _
    $region15: #{custom_model_zentorch_qlinear_x3.1} parent=1 // pred_check_branch
      %29 = sbr.rel (0) target = $region17
    $region16: #{custom_model_zentorch_qlinear_x3.1} parent=1 // pred_region
      _
    $region17: #{custom_model_zentorch_qlinear_x3.1} parent=1 // pred_fallthru
      _
    // Predicated region
    $region18: #{custom_model_zentorch_qlinear_x3.1} parent=1 // pred_check
      _
    $region19: #{custom_model_zentorch_qlinear_x3.1} parent=1 // pred_check_branch
      %31 = sbr.rel (0) target = $region21
    $region20: #{custom_model_zentorch_qlinear_x3.1} parent=1 // pred_region
      _
    $region21: #{custom_model_zentorch_qlinear_x3.1} parent=1 // pred_fallthru
      _
    // Predicated region
    $region22: #{custom_model_zentorch_qlinear_x3.1} parent=1 // pred_check
      _
    $region23: #{custom_model_zentorch_qlinear_x3.1} parent=1 // pred_check_branch
      %33 = sbr.rel (0) target = $region25
    $region24: #{custom_model_zentorch_qlinear_x3.1} parent=1 // pred_region
      _
    $region25: #{custom_model_zentorch_qlinear_x3.1} parent=1 // pred_fallthru
      _
    // Predicated region
    $region26: #{custom_model_zentorch_qlinear_x3.1} parent=1 // pred_check
      _
    $region27: #{custom_model_zentorch_qlinear_x3.1} parent=1 // pred_check_branch
      %35 = sbr.rel (0) target = $region29
    $region28: #{custom_model_zentorch_qlinear_x3.1} parent=1 // pred_region
      _
    $region29: #{custom_model_zentorch_qlinear_x3.1} parent=1 // pred_fallthru
      _
    // Predicated region
    $region30: #{custom_model_zentorch_qlinear_x3.1} parent=1 // pred_check
      _
    $region31: #{custom_model_zentorch_qlinear_x3.1} parent=1 // pred_check_branch
      %37 = sbr.rel (0) target = $region33
    $region32: #{custom_model_zentorch_qlinear_x3.1} parent=1 // pred_region
      %38 = dma.done [#allocation4], 16
    $region33: #{custom_model_zentorch_qlinear_x3.1} parent=1 // pred_fallthru
      _
    %39 = sfence
    %s41 = sld [smem:[#allocation2]]
    %s42 = sld [smem:[#allocation2 + $0x1]]
    %v43 = vld [vmem:[%s2] sm:$0xf]
    %v44 = vld [vmem:[%s2 + $0x4] sm:$0xf]
    %v45 = vld [vmem:[%s2 + $0x8] sm:$0xf]
    %v46 = vld [vmem:[%s2 + $0xc] sm:$0xf]
    %v47 = vld [vmem:[%s3] sm:$0x1]
    %v48 = vld [vmem:[%s4] sm:$0x1]
    %v49 = vld [vmem:[%s5] sm:$0x1]
    %v50 = vld [vmem:[%s6] sm:$0x1]
    %v51 = vld [vmem:[%s1] sm:$0xff]
    %v52 = vstv %s41
    %v53 = vmul.f32 %v51, %v52
    %v54 = vround.ne.pseudo %v53
    %v55 = vstv %s42
    %v56 = vadd.f32 %v54, %v55
    %v57 = vmax.f32 %v56, 0.0
    %v58 = vmin.f32 %v57, 255.0
    %vm59 = vcmask 261120
    %v60 = vsel %vm59, %v58, 0.0
    %61 = vadd.xlane.f32.xlu0 %v60
    %v62 = vpop.xlane.xlu0 %61
    %v63 = vpack.c.bf16 %v58, %v58
    %v65 = vlaneseq
    %v66 = vshrl.u32 %v65, 7
    %v67 = vsub.s32 0, %v66
    %v68 = vrot.slane %v48, %v67
    %v74 = vunpack.c.l.b16 %v43
    %v75 = vunpack.c.l.b16 %v44
    %v76 = vunpack.c.l.b16 %v45
    %v77 = vunpack.c.l.b16 %v46
    %v78 = vpack.c.b16 %v75, %v74
    %v79 = vpack.c.b16 %v77, %v76
    %v81 = vsel %vm59, %v63, 0
    %v84 = vsel %vm59, %v78, 0
    %v87 = vsel %vm59, %v79, 0
    %89 = vmatprep.subr.bf16.mxu0 0
    %90 = vmatpush1.bf16.xpose.msra.mxu0 %v84
    %91 = vmatprep.subr.bf16.mxu0 0
    %92 = vmatpush1.bf16.xpose.msra.mxu0 %v87
    %93 = vmatprep.subr.bf16.mxu0 0
    %94 = vmatpush1.bf16.xpose.msra.mxu0 0
    %95 = vmatprep.subr.bf16.mxu0 0
    %96 = vmatpush1.bf16.xpose.msra.mxu0 0
    %97 = vmatprep.subr.bf16.mxu0 0
    %98 = vmatpush1.bf16.xpose.msra.mxu0 0
    %99 = vmatprep.subr.bf16.mxu0 0
    %100 = vmatpush1.bf16.xpose.msra.mxu0 0
    %101 = vmatprep.subr.bf16.mxu0 0
    %102 = vmatpush1.bf16.xpose.msra.mxu0 0
    %103 = vmatprep.subr.bf16.mxu0 0
    %104 = vmatpush1.bf16.xpose.msra.mxu0 0
    %105 = vmatprep.subr.bf16.mxu0 0
    %106 = vmatpush1.bf16.xpose.msra.mxu0 0
    %107 = vmatprep.subr.bf16.mxu0 0
    %108 = vmatpush1.bf16.xpose.msra.mxu0 0
    %109 = vmatprep.subr.bf16.mxu0 0
    %110 = vmatpush1.bf16.xpose.msra.mxu0 0
    %111 = vmatprep.subr.bf16.mxu0 0
    %112 = vmatpush1.bf16.xpose.msra.mxu0 0
    %113 = vmatprep.subr.bf16.mxu0 0
    %114 = vmatpush1.bf16.xpose.msra.mxu0 0
    %115 = vmatprep.subr.bf16.mxu0 0
    %116 = vmatpush1.bf16.xpose.msra.mxu0 0
    %117 = vmatprep.subr.bf16.mxu0 0
    %118 = vmatpush1.bf16.xpose.msra.mxu0 0
    %119 = vmatprep.subr.bf16.mxu0 0
    %120 = vmatpush1.bf16.xpose.msra.mxu0 0
    %121 = vmatprep.mubr.bf16.mxu0 0
    %122 = vmatmul.mubr.bf16.gmra.mrb[0].mxu0 %v81
    %v123 = vpop.f32.mrb[0].mxu0
    %v124 = vadd.f32 %v68, %v123
    %v125 = vpop.f32.mrb[0].mxu0
    %v126 = vpop.f32.mrb[0].mxu0
    %v127 = vpop.f32.mrb[0].mxu0
    %128 = vdwg.mxu0
    %v130 = vlaneseq
    %v131 = vshrl.u32 %v130, 7
    %v132 = vsub.s32 0, %v131
    %v133 = vrot.slane %v47, %v132
    %v135 = vmul.f32 %v133, %v62
    %v136 = vsub.f32 %v124, %v135
    %v138 = vlaneseq
    %v139 = vshrl.u32 %v138, 7
    %v140 = vsub.s32 0, %v139
    %v141 = vrot.slane %v49, %v140
    %v143 = vmul.f32 %v136, %v141
    %v145 = vlaneseq
    %v146 = vshrl.u32 %v145, 7
    %v147 = vsub.s32 0, %v146
    %v148 = vrot.slane %v50, %v147
    %v150 = vadd.f32 %v143, %v148
    %v151 = vmul.f32 %v150, %v52
    %v152 = vround.ne.pseudo %v151
    %v153 = vadd.f32 %v152, %v55
    %v154 = vmax.f32 %v153, 0.0
    %v155 = vmin.f32 %v154, 255.0
    %v156 = vsel %vm59, %v155, 0.0
    %157 = vadd.xlane.f32.xlu0 %v156
    %v158 = vpop.xlane.xlu0 %157
    %v159 = vpack.c.bf16 %v155, %v155
    %v161 = vsel %vm59, %v159, 0
    %163 = vmatprep.subr.bf16.mxu0 0
    %164 = vmatpush1.bf16.xpose.msra.mxu0 %v84
    %165 = vmatprep.subr.bf16.mxu0 0
    %166 = vmatpush1.bf16.xpose.msra.mxu0 %v87
    %167 = vmatprep.subr.bf16.mxu0 0
    %168 = vmatpush1.bf16.xpose.msra.mxu0 0
    %169 = vmatprep.subr.bf16.mxu0 0
    %170 = vmatpush1.bf16.xpose.msra.mxu0 0
    %171 = vmatprep.subr.bf16.mxu0 0
    %172 = vmatpush1.bf16.xpose.msra.mxu0 0
    %173 = vmatprep.subr.bf16.mxu0 0
    %174 = vmatpush1.bf16.xpose.msra.mxu0 0
    %175 = vmatprep.subr.bf16.mxu0 0
    %176 = vmatpush1.bf16.xpose.msra.mxu0 0
    %177 = vmatprep.subr.bf16.mxu0 0
    %178 = vmatpush1.bf16.xpose.msra.mxu0 0
    %179 = vmatprep.subr.bf16.mxu0 0
    %180 = vmatpush1.bf16.xpose.msra.mxu0 0
    %181 = vmatprep.subr.bf16.mxu0 0
    %182 = vmatpush1.bf16.xpose.msra.mxu0 0
    %183 = vmatprep.subr.bf16.mxu0 0
    %184 = vmatpush1.bf16.xpose.msra.mxu0 0
    %185 = vmatprep.subr.bf16.mxu0 0
    %186 = vmatpush1.bf16.xpose.msra.mxu0 0
    %187 = vmatprep.subr.bf16.mxu0 0
    %188 = vmatpush1.bf16.xpose.msra.mxu0 0
    %189 = vmatprep.subr.bf16.mxu0 0
    %190 = vmatpush1.bf16.xpose.msra.mxu0 0
    %191 = vmatprep.subr.bf16.mxu0 0
    %192 = vmatpush1.bf16.xpose.msra.mxu0 0
    %193 = vmatprep.subr.bf16.mxu0 0
    %194 = vmatpush1.bf16.xpose.msra.mxu0 0
    %195 = vmatprep.mubr.bf16.mxu0 0
    %196 = vmatmul.mubr.bf16.gmra.mrb[0].mxu0 %v161
    %v197 = vpop.f32.mrb[0].mxu0
    %v198 = vadd.f32 %v68, %v197
    %v199 = vpop.f32.mrb[0].mxu0
    %v200 = vpop.f32.mrb[0].mxu0
    %v201 = vpop.f32.mrb[0].mxu0
    %202 = vdwg.mxu0
    %v203 = vmul.f32 %v133, %v158
    %v204 = vsub.f32 %v198, %v203
    %v205 = vmul.f32 %v204, %v141
    %v206 = vadd.f32 %v205, %v148
    %v207 = vmul.f32 %v206, %v52
    %v208 = vround.ne.pseudo %v207
    %v209 = vadd.f32 %v208, %v55
    %v210 = vmax.f32 %v209, 0.0
    %v211 = vmin.f32 %v210, 255.0
    %v212 = vsel %vm59, %v211, 0.0
    %213 = vadd.xlane.f32.xlu0 %v212
    %v214 = vpop.xlane.xlu0 %213
    %v215 = vpack.c.bf16 %v211, %v211
    %v217 = vsel %vm59, %v215, 0
    %219 = vmatprep.subr.bf16.mxu0 0
    %220 = vmatpush1.bf16.xpose.msra.mxu0 %v84
    %221 = vmatprep.subr.bf16.mxu0 0
    %222 = vmatpush1.bf16.xpose.msra.mxu0 %v87
    %223 = vmatprep.subr.bf16.mxu0 0
    %224 = vmatpush1.bf16.xpose.msra.mxu0 0
    %225 = vmatprep.subr.bf16.mxu0 0
    %226 = vmatpush1.bf16.xpose.msra.mxu0 0
    %227 = vmatprep.subr.bf16.mxu0 0
    %228 = vmatpush1.bf16.xpose.msra.mxu0 0
    %229 = vmatprep.subr.bf16.mxu0 0
    %230 = vmatpush1.bf16.xpose.msra.mxu0 0
    %231 = vmatprep.subr.bf16.mxu0 0
    %232 = vmatpush1.bf16.xpose.msra.mxu0 0
    %233 = vmatprep.subr.bf16.mxu0 0
    %234 = vmatpush1.bf16.xpose.msra.mxu0 0
    %235 = vmatprep.subr.bf16.mxu0 0
    %236 = vmatpush1.bf16.xpose.msra.mxu0 0
    %237 = vmatprep.subr.bf16.mxu0 0
    %238 = vmatpush1.bf16.xpose.msra.mxu0 0
    %239 = vmatprep.subr.bf16.mxu0 0
    %240 = vmatpush1.bf16.xpose.msra.mxu0 0
    %241 = vmatprep.subr.bf16.mxu0 0
    %242 = vmatpush1.bf16.xpose.msra.mxu0 0
    %243 = vmatprep.subr.bf16.mxu0 0
    %244 = vmatpush1.bf16.xpose.msra.mxu0 0
    %245 = vmatprep.subr.bf16.mxu0 0
    %246 = vmatpush1.bf16.xpose.msra.mxu0 0
    %247 = vmatprep.subr.bf16.mxu0 0
    %248 = vmatpush1.bf16.xpose.msra.mxu0 0
    %249 = vmatprep.subr.bf16.mxu0 0
    %250 = vmatpush1.bf16.xpose.msra.mxu0 0
    %251 = vmatprep.mubr.bf16.mxu0 0
    %252 = vmatmul.mubr.bf16.gmra.mrb[0].mxu0 %v217
    %v253 = vpop.f32.mrb[0].mxu0
    %v254 = vadd.f32 %v68, %v253
    %v255 = vpop.f32.mrb[0].mxu0
    %v256 = vpop.f32.mrb[0].mxu0
    %v257 = vpop.f32.mrb[0].mxu0
    %258 = vdwg.mxu0
    %v259 = vmul.f32 %v133, %v214
    %v260 = vsub.f32 %v254, %v259
    %v261 = vmul.f32 %v260, %v141
    %v262 = vadd.f32 %v261, %v148
    %263 = vst.msk [vmem:[#allocation5] sm:$0xff] %vm59, %v262
    // Predicated region
    $region34: #{custom_model_zentorch_qlinear_x3.1} parent=1 // pred_check
      _
    $region35: #{custom_model_zentorch_qlinear_x3.1} parent=1 // pred_check_branch
      %265 = sbr.rel (0) target = $region37
    $region36: #{custom_model_zentorch_qlinear_x3.1} parent=1 // pred_region
      %s267 = ssub.s32 128, 128
      %268 = vsyncadd [#allocation3], %s267
      %s270 = sshll.u32 [#allocation5], 4
      %s271 = int_to_ptr.vmem [resolvable:$true] %s270
      %273 = dma.vmem_to_hbm [thread:$0]  %s271, 128, %s7, [#allocation3]
    $region37: #{custom_model_zentorch_qlinear_x3.1} parent=1 // pred_fallthru
      _
    // Predicated region
    $region38: #{custom_model_zentorch_qlinear_x3.1} parent=1 // pred_check
      _
    $region39: #{custom_model_zentorch_qlinear_x3.1} parent=1 // pred_check_branch
      %275 = sbr.rel (0) target = $region41
    $region40: #{custom_model_zentorch_qlinear_x3.1} parent=1 // pred_region
      %276 = dma.done [#allocation3], 128
    $region41: #{custom_model_zentorch_qlinear_x3.1} parent=1 // pred_fallthru
      _
    %277 = vsyncpa [#allocation3], 1
    %278 = vsyncpa [#allocation4], 1

</llo_original>
